<compile_context>
chip_gen: v7x
topology: tpu7x:2x2x1
jax: 0.10.0
libtpu: 0.0.40
codegen_flags: <defaults>
</compile_context>

<pallas_src>
import jax
import jax.numpy as jnp
import numpy as np
from jax.experimental import pallas as pl
from jax.experimental.pallas import tpu as pltpu

LANE = 128  # TPU vreg lane width


def _conv3x3_kernel(w_ref, b_ref, x_ref, o_ref, pad_ref):
    """Single-channel 3x3 valid convolution, whole batch in one invocation.

    w_ref:   (9,)          f32 SMEM  conv weight, flat (w[3*ki+kj])
    b_ref:   (1,)          f32 SMEM  conv bias
    x_ref:   (N*H, W)      f32 VMEM  raw input, (N, H) folded onto sublanes
    o_ref:   (N, Ho, Wo)   f32 VMEM  compact valid-conv output
    pad_ref: (N*H+2, 128)  f32 VMEM  scratch: lane-dense zero-padded slab

    Correctness invariants (do not break):
      * Row coupling: slab row g = b*H + r with r >= Ho reads rows of the NEXT
        image (or the two trailing zero rows); those acc rows are never stored
        to o_ref.  Keep Ho = H-2 and the per-image output slice in sync.
      * Lane wrap: the two pltpu.roll's wrap columns 0..1 into lanes 126..127;
        this is safe only while Wo <= 126 (wrapper asserts W <= 128).
    """
    rows, w = x_ref.shape                 # rows = N*H, w = W (unpadded)
    n, ho, wo = o_ref.shape
    h = rows // n
    slab_rows, lanes = pad_ref.shape       # (rows + 2, 128)

    # Build the zero-padded, lane-dense working slab inside the kernel
    # (replaces the wrapper-side jnp.pad XLA op).
    pad_ref[...] = jnp.zeros((slab_rows, lanes), jnp.float32)
    pad_ref[0:rows, 0:w] = x_ref[...]

    x0 = pad_ref[...]                        # col c -> x[:, c]
    # Hoisted column taps: 2 XLU lane-rolls on the full slab (was 6 in-loop).
    x1 = pltpu.roll(x0, lanes - 1, axis=1)   # col c -> x[:, c+1]
    x2 = pltpu.roll(x0, lanes - 2, axis=1)   # col c -> x[:, c+2]
    taps = (x0, x1, x2)

    # Start the accumulator at the bias (saves a final full-slab add).
    acc = jnp.full((rows, lanes), b_ref[0], dtype=jnp.float32)
    for ki in range(3):                      # row taps: static sublane slices
        for kj in range(3):
            acc = acc + w_ref[3 * ki + kj] * taps[kj][ki:ki + rows, :]

    # Compact per-image output: acc row g = b*H + r holds conv[b, r, :] for
    # r < Ho; rows r >= Ho (cross-image / zero-pad mixes) are never written.
    for b in range(n):
        o_ref[b, :, :] = acc[b * h:b * h + ho, 0:wo]


def conv2d_1x1x3x3(x_nchw, weight, bias):
    """Conv2d(1, 1, kernel_size=3, stride=1, padding=0, bias=True).

    x_nchw: (N, 1, H, W) float32
    weight: (1, 1, 3, 3) float32
    bias:   (1,)         float32
    returns (N, 1, H-2, W-2) float32
    """
    n, c, h, w = x_nchw.shape
    assert c == 1 and h >= 3, "expects single-channel input with H >= 3"
    # W must fit one 128-lane vreg row, and Wo <= 126 so the roll wraparound
    # only lands in discarded lanes (see kernel invariants).
    assert 3 <= w <= LANE, "W must be in [3, 128] for this layout"
    ho, wo = h - 2, w - 2
    rows = n * h

    # Fold (N, H) onto the sublane axis; free reshape, no padding here.
    x_rows = x_nchw.reshape(rows, w).astype(jnp.float32)

    out = pl.pallas_call(
        _conv3x3_kernel,
        out_shape=jax.ShapeDtypeStruct((n, ho, wo), jnp.float32),
        in_specs=[
            pl.BlockSpec(memory_space=pltpu.MemorySpace.SMEM),   # weight (9,)
            pl.BlockSpec(memory_space=pltpu.MemorySpace.SMEM),   # bias (1,)
            pl.BlockSpec(memory_space=pltpu.MemorySpace.VMEM),   # x (N*H, W)
        ],
        out_specs=pl.BlockSpec(memory_space=pltpu.MemorySpace.VMEM),
        scratch_shapes=[pltpu.VMEM((rows + 2, LANE), jnp.float32)],
        cost_estimate=pl.CostEstimate(
            flops=18 * rows * LANE,                 # 9 mul + 9 add per slab elem
            transcendentals=0,
            bytes_accessed=4 * (rows * w + n * ho * wo)),
    )(weight.reshape(-1).astype(jnp.float32),       # flat (9,) SMEM
      bias.astype(jnp.float32),
      x_rows)

    # Only a unit channel dim to insert; no slicing / un-padding XLA ops.
    return out[:, None, :, :].astype(x_nchw.dtype)


if __name__ == "__main__":
    key = jax.random.PRNGKey(0)
    kx, kw, kb = jax.random.split(key, 3)

    # Small shapes consistent with the module: N=2, C=1, H=W=16.
    x = jax.random.normal(kx, (2, 1, 16, 16), dtype=jnp.float32)

    # Deterministic parameter init (PyTorch-style uniform bound 1/sqrt(fan_in)).
    fan_in = 1 * 3 * 3
    bound = 1.0 / np.sqrt(fan_in)
    weight = jax.random.uniform(kw, (1, 1, 3, 3), jnp.float32, -bound, bound)
    bias = jax.random.uniform(kb, (1,), jnp.float32, -bound, bound)

    y = conv2d_1x1x3x3(x, weight, bias)
    y = jax.block_until_ready(y)

    # Sanity check against XLA's conv (same semantics as nn.Conv2d valid conv).
    ref = jax.lax.conv_general_dilated(
        x, weight, window_strides=(1, 1), padding="VALID",
        dimension_numbers=("NCHW", "OIHW", "NCHW")) + bias[None, :, None, None]
    np.testing.assert_allclose(np.asarray(y), np.asarray(ref), rtol=1e-5, atol=1e-5)

    print("KERNEL_OK")
</pallas_src>

<mosaic_0001>
module attributes {stable_mosaic.version = 11 : i64} {
  func.func @_conv3x3_kernel(%arg0: memref<9xf32, #tpu.memory_space<smem>>, %arg1: memref<1xf32, #tpu.memory_space<smem>>, %arg2: memref<32x16xf32, #tpu.memory_space<vmem>>, %arg3: memref<2x14x14xf32, #tpu.memory_space<vmem>>, %arg4: memref<34x128xf32, #tpu.memory_space<vmem>>) attributes {dimension_semantics = [], scalar_prefetch = 0 : i64, scratch_operands = 1 : i64, tpu.core_type = #tpu.core_type<tc>} {
    %cst = arith.constant 0.000000e+00 : f32
    %0 = vector.broadcast %cst : f32 to vector<34x128xf32>
    %c0 = arith.constant 0 : index
    %c0_0 = arith.constant 0 : index
    %1 = vector.load %arg4[%c0, %c0_0] : memref<34x128xf32, #tpu.memory_space<vmem>>, vector<34x128xf32>
    tpu.vector_store %arg4[%c0, %c0_0], %0 {strides = array<i32>} : memref<34x128xf32, #tpu.memory_space<vmem>>, vector<34x128xf32>,
    %c0_1 = arith.constant 0 : index
    %c0_2 = arith.constant 0 : index
    %2 = vector.load %arg2[%c0_1, %c0_2] : memref<32x16xf32, #tpu.memory_space<vmem>>, vector<32x16xf32>
    %c0_3 = arith.constant 0 : index
    %c0_4 = arith.constant 0 : index
    %3 = vector.load %arg4[%c0_3, %c0_4] : memref<34x128xf32, #tpu.memory_space<vmem>>, vector<32x16xf32>
    tpu.vector_store %arg4[%c0_3, %c0_4], %2 {strides = array<i32>} : memref<34x128xf32, #tpu.memory_space<vmem>>, vector<32x16xf32>,
    %c0_5 = arith.constant 0 : index
    %c0_6 = arith.constant 0 : index
    %4 = vector.load %arg4[%c0_5, %c0_6] : memref<34x128xf32, #tpu.memory_space<vmem>>, vector<34x128xf32>
    %c127_i32 = arith.constant 127 : i32
    %5 = tpu.dynamic_rotate %4 by %c127_i32 dim 1 : vector<34x128xf32>, i32 -> vector<34x128xf32>
    %c126_i32 = arith.constant 126 : i32
    %6 = tpu.dynamic_rotate %4 by %c126_i32 dim 1 : vector<34x128xf32>, i32 -> vector<34x128xf32>
    %c0_7 = arith.constant 0 : index
    %7 = memref.load %arg1[%c0_7] : memref<1xf32, #tpu.memory_space<smem>>
    %8 = vector.broadcast %7 : f32 to vector<32x128xf32>
    %c0_8 = arith.constant 0 : index
    %9 = memref.load %arg0[%c0_8] : memref<9xf32, #tpu.memory_space<smem>>
    %10 = vector.extract_strided_slice %4 {offsets = [0, 0], sizes = [32, 128], strides = [1, 1]} : vector<34x128xf32> to vector<32x128xf32>
    %11 = vector.broadcast %9 : f32 to vector<32x128xf32>
    %12 = arith.mulf %11, %10 : vector<32x128xf32>
    %13 = arith.addf %8, %12 : vector<32x128xf32>
    %c1 = arith.constant 1 : index
    %14 = memref.load %arg0[%c1] : memref<9xf32, #tpu.memory_space<smem>>
    %15 = vector.extract_strided_slice %5 {offsets = [0, 0], sizes = [32, 128], strides = [1, 1]} : vector<34x128xf32> to vector<32x128xf32>
    %16 = vector.broadcast %14 : f32 to vector<32x128xf32>
    %17 = arith.mulf %16, %15 : vector<32x128xf32>
    %18 = arith.addf %13, %17 : vector<32x128xf32>
    %c2 = arith.constant 2 : index
    %19 = memref.load %arg0[%c2] : memref<9xf32, #tpu.memory_space<smem>>
    %20 = vector.extract_strided_slice %6 {offsets = [0, 0], sizes = [32, 128], strides = [1, 1]} : vector<34x128xf32> to vector<32x128xf32>
    %21 = vector.broadcast %19 : f32 to vector<32x128xf32>
    %22 = arith.mulf %21, %20 : vector<32x128xf32>
    %23 = arith.addf %18, %22 : vector<32x128xf32>
    %c3 = arith.constant 3 : index
    %24 = memref.load %arg0[%c3] : memref<9xf32, #tpu.memory_space<smem>>
    %25 = vector.extract_strided_slice %4 {offsets = [1, 0], sizes = [32, 128], strides = [1, 1]} : vector<34x128xf32> to vector<32x128xf32>
    %26 = vector.broadcast %24 : f32 to vector<32x128xf32>
    %27 = arith.mulf %26, %25 : vector<32x128xf32>
    %28 = arith.addf %23, %27 : vector<32x128xf32>
    %c4 = arith.constant 4 : index
    %29 = memref.load %arg0[%c4] : memref<9xf32, #tpu.memory_space<smem>>
    %30 = vector.extract_strided_slice %5 {offsets = [1, 0], sizes = [32, 128], strides = [1, 1]} : vector<34x128xf32> to vector<32x128xf32>
    %31 = vector.broadcast %29 : f32 to vector<32x128xf32>
    %32 = arith.mulf %31, %30 : vector<32x128xf32>
    %33 = arith.addf %28, %32 : vector<32x128xf32>
    %c5 = arith.constant 5 : index
    %34 = memref.load %arg0[%c5] : memref<9xf32, #tpu.memory_space<smem>>
    %35 = vector.extract_strided_slice %6 {offsets = [1, 0], sizes = [32, 128], strides = [1, 1]} : vector<34x128xf32> to vector<32x128xf32>
    %36 = vector.broadcast %34 : f32 to vector<32x128xf32>
    %37 = arith.mulf %36, %35 : vector<32x128xf32>
    %38 = arith.addf %33, %37 : vector<32x128xf32>
    %c6 = arith.constant 6 : index
    %39 = memref.load %arg0[%c6] : memref<9xf32, #tpu.memory_space<smem>>
    %40 = vector.extract_strided_slice %4 {offsets = [2, 0], sizes = [32, 128], strides = [1, 1]} : vector<34x128xf32> to vector<32x128xf32>
    %41 = vector.broadcast %39 : f32 to vector<32x128xf32>
    %42 = arith.mulf %41, %40 : vector<32x128xf32>
    %43 = arith.addf %38, %42 : vector<32x128xf32>
    %c7 = arith.constant 7 : index
    %44 = memref.load %arg0[%c7] : memref<9xf32, #tpu.memory_space<smem>>
    %45 = vector.extract_strided_slice %5 {offsets = [2, 0], sizes = [32, 128], strides = [1, 1]} : vector<34x128xf32> to vector<32x128xf32>
    %46 = vector.broadcast %44 : f32 to vector<32x128xf32>
    %47 = arith.mulf %46, %45 : vector<32x128xf32>
    %48 = arith.addf %43, %47 : vector<32x128xf32>
    %c8 = arith.constant 8 : index
    %49 = memref.load %arg0[%c8] : memref<9xf32, #tpu.memory_space<smem>>
    %50 = vector.extract_strided_slice %6 {offsets = [2, 0], sizes = [32, 128], strides = [1, 1]} : vector<34x128xf32> to vector<32x128xf32>
    %51 = vector.broadcast %49 : f32 to vector<32x128xf32>
    %52 = arith.mulf %51, %50 : vector<32x128xf32>
    %53 = arith.addf %48, %52 : vector<32x128xf32>
    %54 = vector.extract_strided_slice %53 {offsets = [0, 0], sizes = [14, 14], strides = [1, 1]} : vector<32x128xf32> to vector<14x14xf32>
    %c0_9 = arith.constant 0 : index
    %c0_10 = arith.constant 0 : index
    %c0_11 = arith.constant 0 : index
    %55 = vector.load %arg3[%c0_9, %c0_10, %c0_11] : memref<2x14x14xf32, #tpu.memory_space<vmem>>, vector<1x14x14xf32>
    %56 = vector.shape_cast %55 : vector<1x14x14xf32> to vector<14x14xf32>
    %57 = vector.shape_cast %54 : vector<14x14xf32> to vector<1x14x14xf32>
    tpu.vector_store %arg3[%c0_9, %c0_10, %c0_11], %57 {strides = array<i32>} : memref<2x14x14xf32, #tpu.memory_space<vmem>>, vector<1x14x14xf32>,
    %58 = vector.extract_strided_slice %53 {offsets = [16, 0], sizes = [14, 14], strides = [1, 1]} : vector<32x128xf32> to vector<14x14xf32>
    %c1_12 = arith.constant 1 : index
    %c0_13 = arith.constant 0 : index
    %c0_14 = arith.constant 0 : index
    %59 = vector.load %arg3[%c1_12, %c0_13, %c0_14] : memref<2x14x14xf32, #tpu.memory_space<vmem>>, vector<1x14x14xf32>
    %60 = vector.shape_cast %59 : vector<1x14x14xf32> to vector<14x14xf32>
    %61 = vector.shape_cast %58 : vector<14x14xf32> to vector<1x14x14xf32>
    tpu.vector_store %arg3[%c1_12, %c0_13, %c0_14], %61 {strides = array<i32>} : memref<2x14x14xf32, #tpu.memory_space<vmem>>, vector<1x14x14xf32>,
    return
  }
}

</mosaic_0001>

<llo_original>
// kernel: tpu_custom_call.1
$region0: #{tpu_custom_call.1}
  #allocation0 [shape = 'u32[]', space=smem, size = 0x4, offset = 0x4, fixed_abs, tag = 'smem constant byte address 0x4 - core index']
  #allocation1 [shape = 'u32[144,128]{1,0:T(1,128)}', space=vmem, size = 0x12000, scoped, tag = 'internal scratch']
  #allocation2 [shape = 'f32[34,128]{1,0:T(8,128)}', space=vmem, size = 0x5000, scoped, tag = 'scratch operand']
  #allocation3 [shape = 'f32[1]{0:T(128)S(6)}', space=smem, size = 0x200, scoped, tag = 'scoped memory for tpu_custom_call.1']
  %s0 = inlined_call_operand.vmem [shape: f32[9], index: 0, kind: input, shape index: {}]
  %s1 = inlined_call_operand.<no memory space> [shape: f32[1], index: 1, kind: input, shape index: {}]
  %s2 = inlined_call_operand.vmem [shape: f32[32,16], index: 2, kind: input, shape index: {}]
  %s3 = inlined_call_operand.vmem [shape: f32[2,14,14], index: 3, kind: output, shape index: {}]
  %s4 = sld [smem:[#allocation0]]
  $region26: #{tpu_custom_call.1} parent=0
    _
  %s6 = ssub.s32 1, %s4
  %s7 = scalar_select 0, %s6, %s4
  %8 = sst [smem:[#allocation3]] %s1
  $region1: #{tpu_custom_call.1} parent=0
    #allocation4 [shape = 'u8[512]{0}', space=smem, size = 0x200, scoped, tag = 'input window, operand 0, single buffered']
    #allocation5 [shape = 's32[1]{0}', space=sflag, size = 0x4, scoped, tag = 'scoped memory for tpu_custom_call.1']
    %9 = vsyncpa [#allocation5], 0
    // Predicated region
    $region2: #{tpu_custom_call.1} parent=1 // pred_check
      _
    $region3: #{tpu_custom_call.1} parent=1 // pred_check_branch
      %11 = sbr.rel (0) target = $region5
    $region4: #{tpu_custom_call.1} parent=1 // pred_region
      %s13 = ssub.s32 16, 16
      %14 = vsyncadd [#allocation5], %s13
      %s16 = sshll.u32 %s0, 4
      %s17 = int_to_ptr.vmem [resolvable:$true] %s16
      %19 = dma.vmem_to_smem %s17, 16, [#allocation4], [#allocation5]
    $region5: #{tpu_custom_call.1} parent=1 // pred_fallthru
      _
    // Predicated region
    $region6: #{tpu_custom_call.1} parent=1 // pred_check
      _
    $region7: #{tpu_custom_call.1} parent=1 // pred_check_branch
      %21 = sbr.rel (0) target = $region9
    $region8: #{tpu_custom_call.1} parent=1 // pred_region
      _
    $region9: #{tpu_custom_call.1} parent=1 // pred_fallthru
      _
    // Predicated region
    $region10: #{tpu_custom_call.1} parent=1 // pred_check
      _
    $region11: #{tpu_custom_call.1} parent=1 // pred_check_branch
      %23 = sbr.rel (0) target = $region13
    $region12: #{tpu_custom_call.1} parent=1 // pred_region
      _
    $region13: #{tpu_custom_call.1} parent=1 // pred_fallthru
      _
    // Predicated region
    $region14: #{tpu_custom_call.1} parent=1 // pred_check
      _
    $region15: #{tpu_custom_call.1} parent=1 // pred_check_branch
      %25 = sbr.rel (0) target = $region17
    $region16: #{tpu_custom_call.1} parent=1 // pred_region
      %26 = dma.done [#allocation5], 16
    $region17: #{tpu_custom_call.1} parent=1 // pred_fallthru
      _
    %27 = sfence
    %28 = vst [vmem:[#allocation2] sm:$0xff] 0.0
    %29 = vst [vmem:[#allocation2 + $0x8] sm:$0xff] 0.0
    %30 = vst [vmem:[#allocation2 + $0x10] sm:$0xff] 0.0
    %31 = vst [vmem:[#allocation2 + $0x18] sm:$0xff] 0.0
    %32 = vst [vmem:[#allocation2 + $0x20] sm:$0x3] 0.0
    %v33 = vld [vmem:[%s2] sm:$0xff]
    %v34 = vld [vmem:[%s2 + $0x8] sm:$0xff]
    %v35 = vld [vmem:[%s2 + $0x10] sm:$0xff]
    %v36 = vld [vmem:[%s2 + $0x18] sm:$0xff]
    %vm37 = vcmask 130048
    %38 = vst.msk [vmem:[#allocation2] sm:$0xff] %vm37, %v33
    %39 = vst.msk [vmem:[#allocation2 + $0x8] sm:$0xff] %vm37, %v34
    %40 = vst.msk [vmem:[#allocation2 + $0x10] sm:$0xff] %vm37, %v35
    %41 = vst.msk [vmem:[#allocation2 + $0x18] sm:$0xff] %vm37, %v36
    %v42 = vld [vmem:[#allocation2] sm:$0xff]
    %v43 = vld [vmem:[#allocation2 + $0x8] sm:$0xff]
    %v44 = vld [vmem:[#allocation2 + $0x10] sm:$0xff]
    %v45 = vld [vmem:[#allocation2 + $0x18] sm:$0xff]
    %v46 = vld [vmem:[#allocation2 + $0x20] sm:$0x3]
    %47 = vrot.lane.b32.xlu0 %v42, 127
    %v48 = vpop.permute.xlu0 %47
    %49 = vrot.lane.b32.xlu0 %v43, 127
    %v50 = vpop.permute.xlu0 %49
    %51 = vrot.lane.b32.xlu0 %v44, 127
    %v52 = vpop.permute.xlu0 %51
    %53 = vrot.lane.b32.xlu0 %v45, 127
    %v54 = vpop.permute.xlu0 %53
    %55 = vrot.lane.b32.xlu0 %v46, 127
    %v56 = vpop.permute.xlu0 %55
    %57 = vrot.lane.b32.xlu0 %v42, 126
    %v58 = vpop.permute.xlu0 %57
    %59 = vrot.lane.b32.xlu0 %v43, 126
    %v60 = vpop.permute.xlu0 %59
    %61 = vrot.lane.b32.xlu0 %v44, 126
    %v62 = vpop.permute.xlu0 %61
    %63 = vrot.lane.b32.xlu0 %v45, 126
    %v64 = vpop.permute.xlu0 %63
    %65 = vrot.lane.b32.xlu0 %v46, 126
    %v66 = vpop.permute.xlu0 %65
    %s67 = sld [smem:[#allocation3]]
    %v68 = vstv %s67
    %s69 = sld [smem:[#allocation4]]
    %v70 = vstv %s69
    %v71 = vmul.f32 %v70, %v42
    %v72 = vmul.f32 %v70, %v43
    %v73 = vmul.f32 %v70, %v44
    %v74 = vmul.f32 %v70, %v45
    %v75 = vadd.f32 %v68, %v71
    %v76 = vadd.f32 %v68, %v72
    %v77 = vadd.f32 %v68, %v73
    %v78 = vadd.f32 %v68, %v74
    %s79 = sld [smem:[#allocation4 + $0x1]]
    %v80 = vstv %s79
    %v81 = vmul.f32 %v80, %v48
    %v82 = vmul.f32 %v80, %v50
    %v83 = vmul.f32 %v80, %v52
    %v84 = vmul.f32 %v80, %v54
    %v85 = vadd.f32 %v75, %v81
    %v86 = vadd.f32 %v76, %v82
    %v87 = vadd.f32 %v77, %v83
    %v88 = vadd.f32 %v78, %v84
    %s89 = sld [smem:[#allocation4 + $0x2]]
    %v90 = vstv %s89
    %v91 = vmul.f32 %v90, %v58
    %v92 = vmul.f32 %v90, %v60
    %v93 = vmul.f32 %v90, %v62
    %v94 = vmul.f32 %v90, %v64
    %v95 = vadd.f32 %v85, %v91
    %v96 = vadd.f32 %v86, %v92
    %v97 = vadd.f32 %v87, %v93
    %v98 = vadd.f32 %v88, %v94
    %s99 = sld [smem:[#allocation4 + $0x3]]
    %v100 = vstv %s99
    %v101 = vmul.f32 %v100, %v42
    %v102 = vmul.f32 %v100, %v43
    %v103 = vmul.f32 %v100, %v44
    %v104 = vmul.f32 %v100, %v45
    %v105 = vmul.f32 %v100, %v46
    %vm111 = vcmask 1046528
    %v112 = vrot.slane %v101, 1
    %v113 = vrot.slane %v102, 1
    %v114 = vsel %vm111, %v112, %v113
    %v115 = vrot.slane %v103, 1
    %v116 = vsel %vm111, %v113, %v115
    %v117 = vrot.slane %v104, 1
    %v118 = vsel %vm111, %v115, %v117
    %v119 = vrot.slane %v105, 1
    %v120 = vsel %vm111, %v117, %v119
    %v125 = vadd.f32 %v95, %v114
    %v126 = vadd.f32 %v96, %v116
    %v127 = vadd.f32 %v97, %v118
    %v128 = vadd.f32 %v98, %v120
    %s129 = sld [smem:[#allocation4 + $0x4]]
    %v130 = vstv %s129
    %v131 = vmul.f32 %v130, %v48
    %v132 = vmul.f32 %v130, %v50
    %v133 = vmul.f32 %v130, %v52
    %v134 = vmul.f32 %v130, %v54
    %v135 = vmul.f32 %v130, %v56
    %v141 = vrot.slane %v131, 1
    %v142 = vrot.slane %v132, 1
    %v143 = vsel %vm111, %v141, %v142
    %v144 = vrot.slane %v133, 1
    %v145 = vsel %vm111, %v142, %v144
    %v146 = vrot.slane %v134, 1
    %v147 = vsel %vm111, %v144, %v146
    %v148 = vrot.slane %v135, 1
    %v149 = vsel %vm111, %v146, %v148
    %v154 = vadd.f32 %v125, %v143
    %v155 = vadd.f32 %v126, %v145
    %v156 = vadd.f32 %v127, %v147
    %v157 = vadd.f32 %v128, %v149
    %s158 = sld [smem:[#allocation4 + $0x5]]
    %v159 = vstv %s158
    %v160 = vmul.f32 %v159, %v58
    %v161 = vmul.f32 %v159, %v60
    %v162 = vmul.f32 %v159, %v62
    %v163 = vmul.f32 %v159, %v64
    %v164 = vmul.f32 %v159, %v66
    %v170 = vrot.slane %v160, 1
    %v171 = vrot.slane %v161, 1
    %v172 = vsel %vm111, %v170, %v171
    %v173 = vrot.slane %v162, 1
    %v174 = vsel %vm111, %v171, %v173
    %v175 = vrot.slane %v163, 1
    %v176 = vsel %vm111, %v173, %v175
    %v177 = vrot.slane %v164, 1
    %v178 = vsel %vm111, %v175, %v177
    %v183 = vadd.f32 %v154, %v172
    %v184 = vadd.f32 %v155, %v174
    %v185 = vadd.f32 %v156, %v176
    %v186 = vadd.f32 %v157, %v178
    %s187 = sld [smem:[#allocation4 + $0x6]]
    %v188 = vstv %s187
    %v189 = vmul.f32 %v188, %v42
    %v190 = vmul.f32 %v188, %v43
    %v191 = vmul.f32 %v188, %v44
    %v192 = vmul.f32 %v188, %v45
    %v193 = vmul.f32 %v188, %v46
    %vm199 = vcmask 1045504
    %v200 = vrot.slane %v189, 2
    %v201 = vrot.slane %v190, 2
    %v202 = vsel %vm199, %v200, %v201
    %v203 = vrot.slane %v191, 2
    %v204 = vsel %vm199, %v201, %v203
    %v205 = vrot.slane %v192, 2
    %v206 = vsel %vm199, %v203, %v205
    %v207 = vrot.slane %v193, 2
    %v208 = vsel %vm199, %v205, %v207
    %v213 = vadd.f32 %v183, %v202
    %v214 = vadd.f32 %v184, %v204
    %v215 = vadd.f32 %v185, %v206
    %v216 = vadd.f32 %v186, %v208
    %s217 = sld [smem:[#allocation4 + $0x7]]
    %v218 = vstv %s217
    %v219 = vmul.f32 %v218, %v48
    %v220 = vmul.f32 %v218, %v50
    %v221 = vmul.f32 %v218, %v52
    %v222 = vmul.f32 %v218, %v54
    %v223 = vmul.f32 %v218, %v56
    %v229 = vrot.slane %v219, 2
    %v230 = vrot.slane %v220, 2
    %v231 = vsel %vm199, %v229, %v230
    %v232 = vrot.slane %v221, 2
    %v233 = vsel %vm199, %v230, %v232
    %v234 = vrot.slane %v222, 2
    %v235 = vsel %vm199, %v232, %v234
    %v236 = vrot.slane %v223, 2
    %v237 = vsel %vm199, %v234, %v236
    %v242 = vadd.f32 %v213, %v231
    %v243 = vadd.f32 %v214, %v233
    %v244 = vadd.f32 %v215, %v235
    %v245 = vadd.f32 %v216, %v237
    %s246 = sld [smem:[#allocation4 + $0x8]]
    %v247 = vstv %s246
    %v248 = vmul.f32 %v247, %v58
    %v249 = vmul.f32 %v247, %v60
    %v250 = vmul.f32 %v247, %v62
    %v251 = vmul.f32 %v247, %v64
    %v252 = vmul.f32 %v247, %v66
    %v258 = vrot.slane %v248, 2
    %v259 = vrot.slane %v249, 2
    %v260 = vsel %vm199, %v258, %v259
    %v261 = vrot.slane %v250, 2
    %v262 = vsel %vm199, %v259, %v261
    %v263 = vrot.slane %v251, 2
    %v264 = vsel %vm199, %v261, %v263
    %v265 = vrot.slane %v252, 2
    %v266 = vsel %vm199, %v263, %v265
    %v271 = vadd.f32 %v242, %v260
    %v272 = vadd.f32 %v243, %v262
    %v273 = vadd.f32 %v244, %v264
    %v274 = vadd.f32 %v245, %v266
    %vm275 = vcmask 113664
    %276 = vst.msk [vmem:[%s3] sm:$0xff] %vm275, %v271
    %vm277 = vcmask 111616
    %278 = vst.msk [vmem:[%s3 + $0x8] sm:$0x3f] %vm277, %v272
    %s279 = scalar_lea.vmem %s3, 16
    %280 = vst.msk [vmem:[%s279] sm:$0xff] %vm275, %v273
    %281 = vst.msk [vmem:[%s279 + $0x8] sm:$0x3f] %vm277, %v274
    // Predicated region
    $region18: #{tpu_custom_call.1} parent=1 // pred_check
      _
    $region19: #{tpu_custom_call.1} parent=1 // pred_check_branch
      %283 = sbr.rel (0) target = $region21
    $region20: #{tpu_custom_call.1} parent=1 // pred_region
      _
    $region21: #{tpu_custom_call.1} parent=1 // pred_fallthru
      _
    // Predicated region
    $region22: #{tpu_custom_call.1} parent=1 // pred_check
      _
    $region23: #{tpu_custom_call.1} parent=1 // pred_check_branch
      %285 = sbr.rel (0) target = $region25
    $region24: #{tpu_custom_call.1} parent=1 // pred_region
      _
    $region25: #{tpu_custom_call.1} parent=1 // pred_fallthru
      _
    %286 = vsyncpa [#allocation5], 1

</llo_original>
